<compile_context>
chip_gen: v7x
topology: tpu7x:2x2x1
jax: 0.10.0
libtpu: 0.0.40
codegen_flags: <defaults>
</compile_context>

<pallas_src>
import functools

import jax
import jax.numpy as jnp
from jax import lax
from jax.experimental import pallas as pl
from jax.experimental.pallas import tpu as pltpu


# ---------------------------------------------------------------------------
# In-kernel helpers (operate on (rows, HWP) f32 slabs; HWP = padded H*W on lanes)
# ---------------------------------------------------------------------------
def _grad_pair(x, col_keep, row_keep, w):
    """Absolute spatial gradients (dx, dy) in the flattened lane-packed layout.

    col_keep / row_keep are (1, HWP) f32 {0,1} masks that zero the far-edge wrap
    (and any pad lanes), matching the concat-with-zeros PyTorch reference exactly.
    """
    hwp = x.shape[-1]
    dx = jnp.abs(x - pltpu.roll(x, hwp - 1, 1)) * col_keep   # right neighbour (i+1)
    dy = jnp.abs(x - pltpu.roll(x, hwp - w, 1)) * row_keep   # below neighbour (i+w)
    return dx, dy


def _fold_lanes(s, out_cols=128):
    """(rows, cols) -> (rows, 128): sum 128-lane chunks (vreg-aligned slices + VPU adds)."""
    rows, cols = s.shape
    assert cols % out_cols == 0
    out = s[:, 0:out_cols]
    for k in range(1, cols // out_cols):
        out = out + s[:, k * out_cols:(k + 1) * out_cols]
    return out


def _fold_sublanes(s, out_rows=8):
    """(rows, cols) -> (8, cols): sum sublane row-groups (VPU adds, tiny zero-pad for tails)."""
    rows, cols = s.shape
    out = s[0:min(rows, out_rows), :]
    if rows < out_rows:
        out = jnp.pad(out, ((0, out_rows - rows), (0, 0)))
    for k in range(1, (rows + out_rows - 1) // out_rows):
        lo = k * out_rows
        hi = min(lo + out_rows, rows)
        blk = s[lo:hi, :]
        if hi - lo < out_rows:
            blk = jnp.pad(blk, ((0, out_rows - (hi - lo)), (0, 0)))
        out = out + blk
    return out


def _fold_to_vreg(s):
    """(rows, cols) -> (8, 128) partial sum; no cross-lane XLU reduce (wrapper finishes it)."""
    return _fold_sublanes(_fold_lanes(s))


def _maybe_mask_channel_tail(x, c, tc):
    """Zero channels past C in the (padded) tail block of a cdiv channel grid."""
    if c % tc != 0:
        rem = c - pl.program_id(1) * tc
        ch = lax.broadcasted_iota(jnp.int32, x.shape, 0)
        x = jnp.where(ch < rem, x, 0.0)
    return x


# ---------------------------------------------------------------------------
# Kernels
# ---------------------------------------------------------------------------
def _feat_smooth_kernel(mask_ref, feat_ref, grad_ref, sums_ref, *, w, eps, c, tc):
    col_keep = mask_ref[0:1, :]
    row_keep = mask_ref[1:2, :]

    x = _maybe_mask_channel_tail(feat_ref[...].astype(jnp.float32), c, tc)   # (tc, HWP)

    dx, dy = _grad_pair(x, col_keep, row_keep, w)
    dxx, dxy = _grad_pair(dx, col_keep, row_keep, w)
    acc = _fold_to_vreg(dxy)                       # fold immediately -> dxy/dx die
    dyx, dyy = _grad_pair(dy, col_keep, row_keep, w)
    acc = acc + _fold_to_vreg(dyx)                 # dyx/dy die
    grad_ref[...] = jnp.sqrt(jnp.maximum(dxx * dxx + dyy * dyy, eps)).astype(grad_ref.dtype)
    acc = acc + _fold_to_vreg(dxx) + _fold_to_vreg(dyy)
    sums_ref[...] = acc                            # (8,128) lane-dense, unmasked store


def _feat_smooth_edge_kernel(mask_ref, wmap_ref, feat_ref, grad_ref, sums_ref, *, w, eps, c, tc):
    col_keep = mask_ref[0:1, :]
    row_keep = mask_ref[1:2, :]

    x = _maybe_mask_channel_tail(feat_ref[...].astype(jnp.float32), c, tc)   # (tc, HWP)

    dx, dy = _grad_pair(x, col_keep, row_keep, w)
    dxx, dxy = _grad_pair(dx, col_keep, row_keep, w)
    # channel-fold BEFORE the (HWP) edge weight -> C-fold fewer multiplies
    acc = _fold_lanes(_fold_sublanes(dxy) * wmap_ref[2:3, :])
    dyx, dyy = _grad_pair(dy, col_keep, row_keep, w)
    acc = acc + _fold_lanes(_fold_sublanes(dyx) * wmap_ref[3:4, :])
    # feat_grad is computed BEFORE edge weighting (matches PyTorch forward)
    grad_ref[...] = jnp.sqrt(jnp.maximum(dxx * dxx + dyy * dyy, eps)).astype(grad_ref.dtype)
    acc = acc + _fold_lanes(_fold_sublanes(dxx) * wmap_ref[0:1, :])
    acc = acc + _fold_lanes(_fold_sublanes(dyy) * wmap_ref[1:2, :])
    sums_ref[...] = acc


def _edge_weight_kernel(mask_ref, img_ref, wmap_ref, *, w, inv_c):
    """Per-batch edge weights: exp(-laplacian(img) channel-mean), rows = [xx, yy, xy, yx]."""
    col_keep = mask_ref[0:1, :]
    row_keep = mask_ref[1:2, :]
    im = img_ref[...].astype(jnp.float32)                                    # (3, HWP)
    dx, dy = _grad_pair(im, col_keep, row_keep, w)
    dxx, dxy = _grad_pair(dx, col_keep, row_keep, w)
    dyx, dyy = _grad_pair(dy, col_keep, row_keep, w)
    wxx = jnp.exp(-inv_c * jnp.sum(dxx, axis=0, keepdims=True))
    wyy = jnp.exp(-inv_c * jnp.sum(dyy, axis=0, keepdims=True))
    wxy = jnp.exp(-inv_c * jnp.sum(dxy, axis=0, keepdims=True))
    wyx = jnp.exp(-inv_c * jnp.sum(dyx, axis=0, keepdims=True))
    wmap_ref[...] = jnp.concatenate([wxx, wyy, wxy, wyx], axis=0)


# ---------------------------------------------------------------------------
# Tiling helpers
# ---------------------------------------------------------------------------
def _vmem_limit_bytes():
    """Per-generation VMEM limit: ~3/4 of physical (96 MiB on v5e/v6e, 48 MiB on v7x)."""
    cap = 64 << 20
    try:
        info = pltpu.get_tpu_info()
        cap = int(getattr(info, "vmem_capacity_bytes", cap) or cap)
    except Exception:
        pass
    return int(min(cap * 3 // 4, 100 << 20))


def _pick_channel_tile(c, hwp, itemsize, vmem_limit):
    """Largest channel tile whose live f32 intermediates + double-buffered feat-in /
    grad-out pipeline blocks fit ~80% of the VMEM limit."""
    live_f32_slabs = 8                       # peak concurrent (tc, HWP) f32 temporaries
    io_buffers = 4                           # 2x feat input + 2x grad output blocks
    per_ch = hwp * (4 * live_f32_slabs + itemsize * io_buffers)
    target = max(1, int(vmem_limit * 0.8) // per_ch)
    if target >= c or c <= 8:
        return c                             # whole channel dim (block == full dim)
    return max(8, (target // 8) * 8)         # multiple of 8 for clean sublane tiling


# ---------------------------------------------------------------------------
# Wrapper (equivalent of FeatSmoothReg.forward)
# ---------------------------------------------------------------------------
@functools.partial(jax.jit, static_argnames=("use_edges",))
def feat_smooth_reg(feat, img, use_edges=False):
    b, c, h, w = feat.shape
    hw = h * w
    hwp = ((hw + 127) // 128) * 128
    pad = hwp - hw

    # Lane-pack spatial dims: (b, c, h, w) -> (b, c, HWP). Reshape is free; pad only if needed.
    feat_r = feat.reshape(b, c, hw)
    if pad:
        feat_r = jnp.pad(feat_r, ((0, 0), (0, 0), (0, pad)))

    # {0,1} masks (row 0: interior column & valid lane; row 1: interior row), built once.
    idx = jnp.arange(hwp, dtype=jnp.int32)
    col_keep = jnp.logical_and((idx % w) < (w - 1), idx < hw)
    row_keep = idx < (h - 1) * w
    masks = jnp.stack([col_keep, row_keep], axis=0).astype(jnp.float32)      # (2, HWP)

    vmem_limit = _vmem_limit_bytes()
    itemsize = jnp.dtype(feat.dtype).itemsize
    tc = _pick_channel_tile(c, hwp, itemsize, vmem_limit)
    nct = pl.cdiv(c, tc)
    grid = (b, nct)
    eps = float(jnp.finfo(feat.dtype).eps)   # matches ops.eps(feat) in the PyTorch module

    mask_spec = pl.BlockSpec((2, hwp), lambda bi, ci: (0, 0))
    feat_spec = pl.BlockSpec((None, tc, hwp), lambda bi, ci: (bi, ci, 0))
    grad_spec = pl.BlockSpec((None, tc, hwp), lambda bi, ci: (bi, ci, 0))
    sums_spec = pl.BlockSpec((None, None, 8, 128), lambda bi, ci: (bi, ci, 0, 0))

    out_shape = (
        jax.ShapeDtypeStruct((b, c, hwp), feat.dtype),         # feat_grad (lane-packed)
        jax.ShapeDtypeStruct((b, nct, 8, 128), jnp.float32),   # per-tile partial loss sums
    )
    # Both axes parallel: every (bi, ci) writes disjoint grad / sums blocks (v7x 2 TCs).
    cparams = pltpu.CompilerParams(
        dimension_semantics=("parallel", "parallel"),
        vmem_limit_bytes=vmem_limit,
    )
    # TODO(synk): very large H*W with C>8 would additionally need spatial tiling (halo of 2).

    if use_edges:
        c_img = img.shape[1]
        img_r = img.reshape(b, c_img, hw)
        if pad:
            img_r = jnp.pad(img_r, ((0, 0), (0, 0), (0, pad)))
        # Stage 1: per-batch exp(-laplacian(img).mean(ch)) weight maps (tiny kernel).
        wmaps = pl.pallas_call(
            functools.partial(_edge_weight_kernel, w=w, inv_c=1.0 / c_img),
            out_shape=jax.ShapeDtypeStruct((b, 4, hwp), jnp.float32),
            grid=(b,),
            in_specs=[pl.BlockSpec((2, hwp), lambda bi: (0, 0)),
                      pl.BlockSpec((None, c_img, hwp), lambda bi: (bi, 0, 0))],
            out_specs=pl.BlockSpec((None, 4, hwp), lambda bi: (bi, 0, 0)),
            compiler_params=pltpu.CompilerParams(
                dimension_semantics=("parallel",), vmem_limit_bytes=vmem_limit),
        )(masks, img_r)

        wmap_spec = pl.BlockSpec((None, 4, hwp), lambda bi, ci: (bi, 0, 0))
        feat_grad_p, sums = pl.pallas_call(
            functools.partial(_feat_smooth_edge_kernel, w=w, eps=eps, c=c, tc=tc),
            out_shape=out_shape,
            grid=grid,
            in_specs=[mask_spec, wmap_spec, feat_spec],
            out_specs=(grad_spec, sums_spec),
            compiler_params=cparams,
        )(masks, wmaps, feat_r)
    else:
        feat_grad_p, sums = pl.pallas_call(
            functools.partial(_feat_smooth_kernel, w=w, eps=eps, c=c, tc=tc),
            out_shape=out_shape,
            grid=grid,
            in_specs=[mask_spec, feat_spec],
            out_specs=(grad_spec, sums_spec),
            compiler_params=cparams,
        )(masks, feat_r)

    feat_grad = feat_grad_p[..., :hw].reshape(b, c, h, w)
    # loss = mean(dxx) + mean(dyy) + mean(dxy) + mean(dyx), each mean over (b, c, h, w).
    loss = jnp.sum(sums) / (b * c * h * w)
    return loss, {"feat_grad": feat_grad}


# ---------------------------------------------------------------------------
# Pure-JAX reference (mirrors the PyTorch code) for a correctness check
# ---------------------------------------------------------------------------
def _grad_ref(x):
    b, c, h, w = x.shape
    dx = jnp.abs(x[..., :, :-1] - x[..., :, 1:])
    dx = jnp.concatenate([dx, jnp.zeros((b, c, h, 1), x.dtype)], axis=-1)
    dy = jnp.abs(x[..., :-1, :] - x[..., 1:, :])
    dy = jnp.concatenate([dy, jnp.zeros((b, c, 1, w), x.dtype)], axis=-2)
    return dx, dy


def _laplacian_ref(x, ch_mean=False):
    dx, dy = _grad_ref(x)
    dxx, dxy = _grad_ref(dx)
    dyx, dyy = _grad_ref(dy)
    if ch_mean:
        dxx = dxx.mean(axis=1, keepdims=True)
        dxy = dxy.mean(axis=1, keepdims=True)
        dyx = dyx.mean(axis=1, keepdims=True)
        dyy = dyy.mean(axis=1, keepdims=True)
    return dxx, dyy, dxy, dyx


def feat_smooth_ref(feat, img, use_edges=False):
    dxx, dyy, dxy, dyx = _laplacian_ref(feat)
    eps = jnp.finfo(feat.dtype).eps
    feat_grad = jnp.sqrt(jnp.maximum(dxx**2 + dyy**2, eps))
    if use_edges:
        idxx, idyy, idxy, idyx = _laplacian_ref(img, ch_mean=True)
        dxx = dxx * jnp.exp(-idxx)
        dyy = dyy * jnp.exp(-idyy)
        dxy = dxy * jnp.exp(-idxy)
        dyx = dyx * jnp.exp(-idyx)
    loss = dxx.mean() + dyy.mean() + dxy.mean() + dyx.mean()
    return loss, feat_grad


if __name__ == "__main__":
    key = jax.random.PRNGKey(0)
    kf, ki = jax.random.split(key)
    feat = jax.random.normal(kf, (2, 4, 16, 16), jnp.float32)   # (b, c, h, w) feature maps
    img = jax.random.uniform(ki, (2, 3, 16, 16), jnp.float32)   # (b, 3, h, w) image

    for use_edges in (False, True):
        loss, aux = feat_smooth_reg(feat, img, use_edges=use_edges)
        jax.block_until_ready((loss, aux))
        loss_r, grad_r = feat_smooth_ref(feat, img, use_edges=use_edges)
        assert jnp.allclose(loss, loss_r, atol=1e-4, rtol=1e-4), (use_edges, loss, loss_r)
        assert jnp.allclose(aux["feat_grad"], grad_r, atol=1e-4, rtol=1e-4), use_edges

    print("KERNEL_OK")
</pallas_src>

<mosaic_0001>
module attributes {stable_mosaic.version = 11 : i64} {
  func.func @_feat_smooth_kernel(%arg0: i32, %arg1: i32, %arg2: memref<2x256xf32, #tpu.memory_space<vmem>>, %arg3: memref<1x4x256xf32, #tpu.memory_space<vmem>>, %arg4: memref<1x4x256xf32, #tpu.memory_space<vmem>>, %arg5: memref<1x1x8x128xf32, #tpu.memory_space<vmem>>) attributes {dimension_semantics = [#tpu.dimension_semantics<parallel>, #tpu.dimension_semantics<parallel>], iteration_bounds = array<i64: 2, 1>, scalar_prefetch = 0 : i64, scratch_operands = 0 : i64, tpu.core_type = #tpu.core_type<tc>, window_params = [{pipeline_mode = #tpu.pipeline_mode<synchronous>, transform_indices = @transform_0, window_bounds = array<i64: 2, 256>}, {transform_indices = @transform_1, window_bounds = array<i64: 1, 4, 256>}, {transform_indices = @transform_2, window_bounds = array<i64: 1, 4, 256>}, {transform_indices = @transform_3, window_bounds = array<i64: 1, 1, 8, 128>}]} {
    %c0 = arith.constant 0 : index
    %c0_0 = arith.constant 0 : index
    %0 = vector.load %arg2[%c0, %c0_0] : memref<2x256xf32, #tpu.memory_space<vmem>>, vector<1x256xf32>
    %c1 = arith.constant 1 : index
    %c0_1 = arith.constant 0 : index
    %1 = vector.load %arg2[%c1, %c0_1] : memref<2x256xf32, #tpu.memory_space<vmem>>, vector<1x256xf32>
    %c0_2 = arith.constant 0 : index
    %c0_3 = arith.constant 0 : index
    %c0_4 = arith.constant 0 : index
    %2 = vector.load %arg3[%c0_2, %c0_3, %c0_4] : memref<1x4x256xf32, #tpu.memory_space<vmem>>, vector<1x4x256xf32>
    %3 = vector.shape_cast %2 : vector<1x4x256xf32> to vector<4x256xf32>
    %c255_i32 = arith.constant 255 : i32
    %4 = tpu.dynamic_rotate %3 by %c255_i32 dim 1 : vector<4x256xf32>, i32 -> vector<4x256xf32>
    %5 = arith.subf %3, %4 : vector<4x256xf32>
    %6 = math.absf %5 : vector<4x256xf32>
    %7 = vector.broadcast %0 : vector<1x256xf32> to vector<4x256xf32>
    %8 = arith.mulf %6, %7 : vector<4x256xf32>
    %c240_i32 = arith.constant 240 : i32
    %9 = tpu.dynamic_rotate %3 by %c240_i32 dim 1 : vector<4x256xf32>, i32 -> vector<4x256xf32>
    %10 = arith.subf %3, %9 : vector<4x256xf32>
    %11 = math.absf %10 : vector<4x256xf32>
    %12 = vector.broadcast %1 : vector<1x256xf32> to vector<4x256xf32>
    %13 = arith.mulf %11, %12 : vector<4x256xf32>
    %c255_i32_5 = arith.constant 255 : i32
    %14 = tpu.dynamic_rotate %8 by %c255_i32_5 dim 1 : vector<4x256xf32>, i32 -> vector<4x256xf32>
    %15 = arith.subf %8, %14 : vector<4x256xf32>
    %16 = math.absf %15 : vector<4x256xf32>
    %17 = vector.broadcast %0 : vector<1x256xf32> to vector<4x256xf32>
    %18 = arith.mulf %16, %17 : vector<4x256xf32>
    %c240_i32_6 = arith.constant 240 : i32
    %19 = tpu.dynamic_rotate %8 by %c240_i32_6 dim 1 : vector<4x256xf32>, i32 -> vector<4x256xf32>
    %20 = arith.subf %8, %19 : vector<4x256xf32>
    %21 = math.absf %20 : vector<4x256xf32>
    %22 = vector.broadcast %1 : vector<1x256xf32> to vector<4x256xf32>
    %23 = arith.mulf %21, %22 : vector<4x256xf32>
    %24 = vector.extract_strided_slice %23 {offsets = [0, 0], sizes = [4, 128], strides = [1, 1]} : vector<4x256xf32> to vector<4x128xf32>
    %25 = vector.extract_strided_slice %23 {offsets = [0, 128], sizes = [4, 128], strides = [1, 1]} : vector<4x256xf32> to vector<4x128xf32>
    %26 = arith.addf %24, %25 : vector<4x128xf32>
    %c0_i32 = arith.constant 0 : i32
    %27 = arith.sitofp %c0_i32 : i32 to f32
    %28 = vector.broadcast %27 : f32 to vector<4x128xf32>
    %29 = tpu.concatenate %26, %28 in 0 : vector<4x128xf32>, vector<4x128xf32> -> vector<8x128xf32>
    %c255_i32_7 = arith.constant 255 : i32
    %30 = tpu.dynamic_rotate %13 by %c255_i32_7 dim 1 : vector<4x256xf32>, i32 -> vector<4x256xf32>
    %31 = arith.subf %13, %30 : vector<4x256xf32>
    %32 = math.absf %31 : vector<4x256xf32>
    %33 = vector.broadcast %0 : vector<1x256xf32> to vector<4x256xf32>
    %34 = arith.mulf %32, %33 : vector<4x256xf32>
    %c240_i32_8 = arith.constant 240 : i32
    %35 = tpu.dynamic_rotate %13 by %c240_i32_8 dim 1 : vector<4x256xf32>, i32 -> vector<4x256xf32>
    %36 = arith.subf %13, %35 : vector<4x256xf32>
    %37 = math.absf %36 : vector<4x256xf32>
    %38 = vector.broadcast %1 : vector<1x256xf32> to vector<4x256xf32>
    %39 = arith.mulf %37, %38 : vector<4x256xf32>
    %40 = vector.extract_strided_slice %34 {offsets = [0, 0], sizes = [4, 128], strides = [1, 1]} : vector<4x256xf32> to vector<4x128xf32>
    %41 = vector.extract_strided_slice %34 {offsets = [0, 128], sizes = [4, 128], strides = [1, 1]} : vector<4x256xf32> to vector<4x128xf32>
    %42 = arith.addf %40, %41 : vector<4x128xf32>
    %c0_i32_9 = arith.constant 0 : i32
    %43 = arith.sitofp %c0_i32_9 : i32 to f32
    %44 = vector.broadcast %43 : f32 to vector<4x128xf32>
    %45 = tpu.concatenate %42, %44 in 0 : vector<4x128xf32>, vector<4x128xf32> -> vector<8x128xf32>
    %46 = arith.addf %29, %45 : vector<8x128xf32>
    %47 = arith.mulf %18, %18 : vector<4x256xf32>
    %48 = arith.mulf %39, %39 : vector<4x256xf32>
    %49 = arith.addf %47, %48 : vector<4x256xf32>
    %cst = arith.constant 1.1920929E-7 : f32
    %50 = vector.broadcast %cst : f32 to vector<4x256xf32>
    %51 = arith.maximumf %49, %50 : vector<4x256xf32>
    %52 = math.sqrt %51 : vector<4x256xf32>
    %c0_10 = arith.constant 0 : index
    %c0_11 = arith.constant 0 : index
    %c0_12 = arith.constant 0 : index
    %53 = vector.load %arg4[%c0_10, %c0_11, %c0_12] : memref<1x4x256xf32, #tpu.memory_space<vmem>>, vector<1x4x256xf32>
    %54 = vector.shape_cast %53 : vector<1x4x256xf32> to vector<4x256xf32>
    %55 = vector.shape_cast %52 : vector<4x256xf32> to vector<1x4x256xf32>
    tpu.vector_store %arg4[%c0_10, %c0_11, %c0_12], %55 {strides = array<i32>} : memref<1x4x256xf32, #tpu.memory_space<vmem>>, vector<1x4x256xf32>,
    %56 = vector.extract_strided_slice %18 {offsets = [0, 0], sizes = [4, 128], strides = [1, 1]} : vector<4x256xf32> to vector<4x128xf32>
    %57 = vector.extract_strided_slice %18 {offsets = [0, 128], sizes = [4, 128], strides = [1, 1]} : vector<4x256xf32> to vector<4x128xf32>
    %58 = arith.addf %56, %57 : vector<4x128xf32>
    %c0_i32_13 = arith.constant 0 : i32
    %59 = arith.sitofp %c0_i32_13 : i32 to f32
    %60 = vector.broadcast %59 : f32 to vector<4x128xf32>
    %61 = tpu.concatenate %58, %60 in 0 : vector<4x128xf32>, vector<4x128xf32> -> vector<8x128xf32>
    %62 = arith.addf %46, %61 : vector<8x128xf32>
    %63 = vector.extract_strided_slice %39 {offsets = [0, 0], sizes = [4, 128], strides = [1, 1]} : vector<4x256xf32> to vector<4x128xf32>
    %64 = vector.extract_strided_slice %39 {offsets = [0, 128], sizes = [4, 128], strides = [1, 1]} : vector<4x256xf32> to vector<4x128xf32>
    %65 = arith.addf %63, %64 : vector<4x128xf32>
    %c0_i32_14 = arith.constant 0 : i32
    %66 = arith.sitofp %c0_i32_14 : i32 to f32
    %67 = vector.broadcast %66 : f32 to vector<4x128xf32>
    %68 = tpu.concatenate %65, %67 in 0 : vector<4x128xf32>, vector<4x128xf32> -> vector<8x128xf32>
    %69 = arith.addf %62, %68 : vector<8x128xf32>
    %c0_15 = arith.constant 0 : index
    %c0_16 = arith.constant 0 : index
    %c0_17 = arith.constant 0 : index
    %c0_18 = arith.constant 0 : index
    %70 = vector.load %arg5[%c0_15, %c0_16, %c0_17, %c0_18] : memref<1x1x8x128xf32, #tpu.memory_space<vmem>>, vector<1x1x8x128xf32>
    %71 = vector.shape_cast %70 : vector<1x1x8x128xf32> to vector<8x128xf32>
    %72 = vector.shape_cast %69 : vector<8x128xf32> to vector<1x1x8x128xf32>
    tpu.vector_store %arg5[%c0_15, %c0_16, %c0_17, %c0_18], %72 {strides = array<i32>} : memref<1x1x8x128xf32, #tpu.memory_space<vmem>>, vector<1x1x8x128xf32>,
    return
  }
  func.func @transform_0(%arg0: i32, %arg1: i32) -> (i32, i32) {
    %c0_i32 = arith.constant 0 : i32
    %c0_i32_0 = arith.constant 0 : i32
    %c0_i32_1 = arith.constant 0 : i32
    return %c0_i32, %c0_i32_0 : i32, i32
  }
  func.func @transform_1(%arg0: i32, %arg1: i32) -> (i32, i32, i32) {
    %c0_i32 = arith.constant 0 : i32
    %c0_i32_0 = arith.constant 0 : i32
    return %arg0, %arg1, %c0_i32 : i32, i32, i32
  }
  func.func @transform_2(%arg0: i32, %arg1: i32) -> (i32, i32, i32) {
    %c0_i32 = arith.constant 0 : i32
    %c0_i32_0 = arith.constant 0 : i32
    return %arg0, %arg1, %c0_i32 : i32, i32, i32
  }
  func.func @transform_3(%arg0: i32, %arg1: i32) -> (i32, i32, i32, i32) {
    %c0_i32 = arith.constant 0 : i32
    %c0_i32_0 = arith.constant 0 : i32
    %c0_i32_1 = arith.constant 0 : i32
    return %arg0, %arg1, %c0_i32, %c0_i32_0 : i32, i32, i32, i32
  }
}

</mosaic_0001>

<llo_original>
// kernel: feat_smooth_reg.1
$region0: #{feat_smooth_reg.1}
  #allocation0 [shape = 'u32[]', space=smem, size = 0x4, offset = 0x4, fixed_abs, tag = 'smem constant byte address 0x4 - core index']
  #allocation1 [shape = 'u32[144,128]{1,0:T(1,128)}', space=vmem, size = 0x12000, scoped, tag = 'internal scratch']
  %s0 = inlined_call_operand.vmem [shape: f32[2,256], index: 0, kind: input, shape index: {}]
  %s1 = inlined_call_operand.vmem [shape: f32[2,4,256], index: 1, kind: input, shape index: {}]
  %s2 = inlined_call_operand.vmem [shape: f32[2,4,256], index: 2, kind: output, shape index: {0}]
  %s3 = inlined_call_operand.vmem [shape: f32[2,1,8,128], index: 3, kind: output, shape index: {1}]
  %4 = xla_tuple %s2, %s3
  %s5 = sld [smem:[#allocation0]]
  $region49: #{feat_smooth_reg.1} parent=0
    _
  %s7 = ssub.s32 1, %s5
  %s8 = scalar_select 0, %s7, %s5
  loop: start=0, step=1, limit=4
  $region2: #{feat_smooth_reg.1} parent=0 // loop_pre_header
    _
  $region3: #{feat_smooth_reg.1} parent=0 // loop_header
    %s10 = sphi 0, %s14
    %p11 = scmp.ge.s32.totalorder %s10, 4
    %s17 = sphi 0, %s29
    %s18 = sphi 0, %s25
    %s19 = sphi 0, %s17
    %s20 = sphi 0, %s18
    %s21 = sphi 0, %s19
    %s22 = sphi 0, %s20
    %s30 = sphi 0, %s30
    %s32 = sphi 0, %s30
    %s33 = sphi 0, %s32
    %s47 = sphi 0, %s33
    %s55 = sphi 0, %s57
    %s58 = sphi 0, %s55
    %s59 = sphi 0, %s58
    %s75 = sphi 0, %s59
    %s83 = sphi 0, %s85
    %s86 = sphi 0, %s83
    %s87 = sphi 0, %s86
    %s103 = sphi 0, %s87
    %s111 = sphi 0, %s113
    %s114 = sphi 0, %s111
    %s115 = sphi 0, %s114
    %s131 = sphi 0, %s115
  $region4: #{feat_smooth_reg.1} parent=0 // loop_header_branch
    %13 = sbr.rel (%p11) target = $region8
  $region5: #{feat_smooth_reg.1} parent=0 // loop_body
    %s15 = ssub.s32 %s10, 1
    %s16 = ssub.s32 %s10, 2
    %s23 = sadd.s32 1, %s18
    %p24 = scmp.ge.s32.totalorder %s23, 1
    %s25 = scalar_select %p24, 0, %s23
    %s26 = sadd.s32 1, %s17
    %s27 = scalar_select %p24, %s26, %s17
    %p28 = scmp.ge.s32.totalorder %s27, 2
    %s29 = scalar_select %p28, 0, %s27
    %s31 = sadd.s32 %s30, 1
    %p34 = scmp.eq.s32.totalorder %s10, 1
    %p35 = scmp.ne.s32.totalorder %s30, %s32
    %p36 = scmp.eq.s32.totalorder %s10, 0
    %p37 = por %p35, %p36
    %p38 = scmp.ne.s32.totalorder %s30, %s32
    %p39 = scmp.eq.s32.totalorder %s15, 1
    %p40 = por %p38, %p39
    %p41 = scmp.ne.s32.totalorder %s32, %s33
    %p42 = scmp.eq.s32.totalorder %s15, 0
    %p43 = por %p41, %p42
    %p44 = scmp.ne.s32.totalorder %s32, %s33
    %p45 = scmp.eq.s32.totalorder %s16, 1
    %p46 = por %p44, %p45
    %p48 = scmp.ne.s32.totalorder %s33, %s47
    %p49 = scmp.eq.s32.totalorder %s16, 0
    %p50 = por %p48, %p49
    %s51 = ssub.s32 %s17, %s29
    %s52 = ssub.s32 %s18, %s25
    %s53 = sor.u32 %s51, %s52
    %p54 = scmp.eq.s32.totalorder %s53, 0
    %s56 = sadd.s32 %s55, 1
    %s57 = scalar_select %p54, %s55, %s56
    %p60 = pneg %p54
    %p61 = scmp.eq.s32.totalorder %s10, 1
    %p62 = por %p60, %p61
    %p63 = scmp.ne.s32.totalorder %s55, %s58
    %p64 = scmp.eq.s32.totalorder %s10, 0
    %p65 = por %p63, %p64
    %p66 = scmp.ne.s32.totalorder %s55, %s58
    %p67 = scmp.eq.s32.totalorder %s15, 1
    %p68 = por %p66, %p67
    %p69 = scmp.ne.s32.totalorder %s58, %s59
    %p70 = scmp.eq.s32.totalorder %s15, 0
    %p71 = por %p69, %p70
    %p72 = scmp.ne.s32.totalorder %s58, %s59
    %p73 = scmp.eq.s32.totalorder %s16, 1
    %p74 = por %p72, %p73
    %p76 = scmp.ne.s32.totalorder %s59, %s75
    %p77 = scmp.eq.s32.totalorder %s16, 0
    %p78 = por %p76, %p77
    %s79 = ssub.s32 %s17, %s29
    %s80 = ssub.s32 %s18, %s25
    %s81 = sor.u32 %s79, %s80
    %p82 = scmp.eq.s32.totalorder %s81, 0
    %s84 = sadd.s32 %s83, 1
    %s85 = scalar_select %p82, %s83, %s84
    %p88 = pneg %p82
    %p89 = scmp.eq.s32.totalorder %s10, 1
    %p90 = por %p88, %p89
    %p91 = scmp.ne.s32.totalorder %s83, %s86
    %p92 = scmp.eq.s32.totalorder %s10, 0
    %p93 = por %p91, %p92
    %p94 = scmp.ne.s32.totalorder %s83, %s86
    %p95 = scmp.eq.s32.totalorder %s15, 1
    %p96 = por %p94, %p95
    %p97 = scmp.ne.s32.totalorder %s86, %s87
    %p98 = scmp.eq.s32.totalorder %s15, 0
    %p99 = por %p97, %p98
    %p100 = scmp.ne.s32.totalorder %s86, %s87
    %p101 = scmp.eq.s32.totalorder %s16, 1
    %p102 = por %p100, %p101
    %p104 = scmp.ne.s32.totalorder %s87, %s103
    %p105 = scmp.eq.s32.totalorder %s16, 0
    %p106 = por %p104, %p105
    %s107 = ssub.s32 %s17, %s29
    %s108 = ssub.s32 %s18, %s25
    %s109 = sor.u32 %s107, %s108
    %p110 = scmp.eq.s32.totalorder %s109, 0
    %s112 = sadd.s32 %s111, 1
    %s113 = scalar_select %p110, %s111, %s112
    %p116 = pneg %p110
    %p117 = scmp.eq.s32.totalorder %s10, 1
    %p118 = por %p116, %p117
    %p119 = scmp.ne.s32.totalorder %s111, %s114
    %p120 = scmp.eq.s32.totalorder %s10, 0
    %p121 = por %p119, %p120
    %p122 = scmp.ne.s32.totalorder %s111, %s114
    %p123 = scmp.eq.s32.totalorder %s15, 1
    %p124 = por %p122, %p123
    %p125 = scmp.ne.s32.totalorder %s114, %s115
    %p126 = scmp.eq.s32.totalorder %s15, 0
    %p127 = por %p125, %p126
    %p128 = scmp.ne.s32.totalorder %s114, %s115
    %p129 = scmp.eq.s32.totalorder %s16, 1
    %p130 = por %p128, %p129
    %p132 = scmp.ne.s32.totalorder %s115, %s131
    %p133 = scmp.eq.s32.totalorder %s16, 0
    %p134 = por %p132, %p133
    %p135 = scmp.le.s32.totalorder 1, %s10
    %p136 = scmp.lt.s32.totalorder %s10, 3
    %p137 = pnand %p135, %p136
    %p138 = pneg %p137
    // Predicated region
    $region9: #{feat_smooth_reg.1} parent=5 // pred_check
      _
    $region10: #{feat_smooth_reg.1} parent=5 // pred_check_branch
      %140 = sbr.rel (%p137) target = $region12
    $region11: #{feat_smooth_reg.1} parent=5 // pred_region
      %s141 = ssub.s32 %s10, 1
      // Predicated region
      $region13: #{feat_smooth_reg.1} parent=11 // pred_check
        %p142 = pneg %p43
      $region14: #{feat_smooth_reg.1} parent=11 // pred_check_branch
        %144 = sbr.rel (%p142) target = $region16
      $region15: #{feat_smooth_reg.1} parent=11 // pred_region
        _
      $region16: #{feat_smooth_reg.1} parent=11 // pred_fallthru
        _
    $region12: #{feat_smooth_reg.1} parent=5 // pred_fallthru
      _
    %p145 = scmp.lt.s32.totalorder %s10, 2
    // Predicated region
    $region17: #{feat_smooth_reg.1} parent=5 // pred_check
      %p146 = pneg %p145
    $region18: #{feat_smooth_reg.1} parent=5 // pred_check_branch
      %148 = sbr.rel (%p146) target = $region20
    $region19: #{feat_smooth_reg.1} parent=5 // pred_region
      // Predicated region
      $region21: #{feat_smooth_reg.1} parent=19 // pred_check
        %p149 = pneg %p65
      $region22: #{feat_smooth_reg.1} parent=19 // pred_check_branch
        %151 = sbr.rel (%p149) target = $region24
      $region23: #{feat_smooth_reg.1} parent=19 // pred_region
        %p152 = scmp.lt.s32.totalorder %s17, 1
        %s153 = scalar_select %p152, %s17, 1
        %p154 = scmp.lt.s32.totalorder %s18, 0
        %s155 = scalar_select %p154, %s18, 0
        %s156 = smul.addr %s155, 2
        %s157 = smul.addr %s153, 2
        %s158 = sadd.s32 %s156, %s157
        %s159 = smul.addr %s158, 4
        %s160 = scalar_lea.vmem %s1, %s159
      $region24: #{feat_smooth_reg.1} parent=19 // pred_fallthru
        _
    $region20: #{feat_smooth_reg.1} parent=5 // pred_fallthru
      _
    %p161 = scmp.le.s32.totalorder 1, %s10
    %p162 = scmp.lt.s32.totalorder %s10, 3
    %p163 = pnand %p161, %p162
    %p164 = pneg %p163
    // Predicated region
    $region25: #{feat_smooth_reg.1} parent=5 // pred_check
      _
    $region26: #{feat_smooth_reg.1} parent=5 // pred_check_branch
      %166 = sbr.rel (%p163) target = $region28
    $region27: #{feat_smooth_reg.1} parent=5 // pred_region
      %s167 = ssub.s32 %s10, 1
      %p168 = pneg %p43
      %p169 = pneg %p40
      %p170 = scmp.lt.s32.totalorder %s19, 1
      %s171 = scalar_select %p170, %s19, 1
      %p172 = scmp.lt.s32.totalorder %s20, 0
      %s173 = scalar_select %p172, %s20, 0
      %s174 = smul.addr %s173, 2
      %s175 = smul.addr %s171, 2
      %s176 = sadd.s32 %s174, %s175
      %s177 = smul.addr %s176, 4
      %s178 = scalar_lea.vmem %s1, %s177
      %p179 = pneg %p71
      %p180 = pneg %p68
      %p181 = pneg %p99
      %p182 = pneg %p96
      %p183 = scmp.lt.s32.totalorder %s19, 1
      %s184 = scalar_select %p183, %s19, 1
      %p185 = scmp.lt.s32.totalorder %s20, 0
      %s186 = scalar_select %p185, %s20, 0
      %s187 = smul.addr %s186, 2
      %s188 = smul.addr %s184, 2
      %s189 = sadd.s32 %s187, %s188
      %s190 = smul.addr %s189, 4
      %s191 = scalar_lea.vmem %s2, %s190
      %p192 = pneg %p127
      %p193 = pneg %p124
      %p194 = scmp.lt.s32.totalorder %s19, 1
      %s195 = scalar_select %p194, %s19, 1
      %p196 = scmp.lt.s32.totalorder %s20, 0
      %s197 = scalar_select %p196, %s20, 0
      %s198 = sadd.s32 %s197, %s195
      %s199 = smul.addr %s198, 8
      %s200 = scalar_lea.vmem %s3, %s199
      %p201 = scmp.lt.s32.totalorder %s19, 1
      %s202 = scalar_select %p201, %s19, 1
      %p203 = scmp.lt.s32.totalorder %s20, 0
      %s204 = scalar_select %p203, %s20, 0
      %s205 = smul.addr %s204, 2
      %s206 = smul.addr %s202, 2
      %s207 = sadd.s32 %s205, %s206
      %s208 = smul.addr %s207, 4
      %s209 = scalar_lea.vmem %s1, %s208
      %p210 = scmp.lt.s32.totalorder %s19, 1
      %s211 = scalar_select %p210, %s19, 1
      %p212 = scmp.lt.s32.totalorder %s20, 0
      %s213 = scalar_select %p212, %s20, 0
      %s214 = smul.addr %s213, 2
      %s215 = smul.addr %s211, 2
      %s216 = sadd.s32 %s214, %s215
      %s217 = smul.addr %s216, 4
      %s218 = scalar_lea.vmem %s2, %s217
      %p219 = scmp.lt.s32.totalorder %s19, 1
      %s220 = scalar_select %p219, %s19, 1
      %p221 = scmp.lt.s32.totalorder %s20, 0
      %s222 = scalar_select %p221, %s20, 0
      %s223 = sadd.s32 %s222, %s220
      %s224 = smul.addr %s223, 8
      %s225 = scalar_lea.vmem %s3, %s224
      %v226 = vld [vmem:[%s0] ss:$2 sm:$0x3]
      %s227 = scalar_lea.vmem %s0, 1
      %v228 = vld [vmem:[%s227] ss:$2 sm:$0x3]
      %v229 = vld [vmem:[%s209] sm:$0xff]
      %v231 = vcombine.high %v229, %v229
      %233 = vrot.lane.b32.xlu0 %v229, 127
      %v234 = vpop.permute.xlu0 %233
      %235 = vrot.lane.b32.xlu0 %v231, 127
      %v236 = vpop.permute.xlu0 %235
      %v237 = vlaneseq
      %v238 = vand.u32 %v237, 127
      %vm239 = vcmp.lt.s32.totalorder %v238, 127
      %v240 = vsel %vm239, %v234, %v236
      %v241 = vsel %vm239, %v236, %v234
      %v244 = vcombine.low %v240, %v241
      %v246 = vsub.f32 %v229, %v244
      %v247 = vand.u32 2147483647, %v246
      %v249 = vlaneseq
      %v250 = vshrl.u32 %v249, 7
      %v251 = vsub.s32 0, %v250
      %v252 = vrot.slane %v226, %v251
      %v253 = vlaneseq
      %v254 = vshrl.u32 %v253, 7
      %v255 = vsub.s32 1, %v254
      %v256 = vrot.slane %v226, %v255
      %v257 = vcombine.low %v252, %v256
      %v259 = vmul.f32 %v247, %v257
      %260 = vrot.lane.b32.xlu0 %v229, 112
      %v261 = vpop.permute.xlu0 %260
      %262 = vrot.lane.b32.xlu0 %v231, 112
      %v263 = vpop.permute.xlu0 %262
      %vm264 = vcmp.lt.s32.totalorder %v238, 112
      %v265 = vsel %vm264, %v261, %v263
      %v266 = vsel %vm264, %v263, %v261
      %v269 = vcombine.low %v265, %v266
      %v271 = vsub.f32 %v229, %v269
      %v272 = vand.u32 2147483647, %v271
      %v274 = vlaneseq
      %v275 = vshrl.u32 %v274, 7
      %v276 = vsub.s32 0, %v275
      %v277 = vrot.slane %v228, %v276
      %v278 = vlaneseq
      %v279 = vshrl.u32 %v278, 7
      %v280 = vsub.s32 1, %v279
      %v281 = vrot.slane %v228, %v280
      %v282 = vcombine.low %v277, %v281
      %v284 = vmul.f32 %v272, %v282
      %v286 = vcombine.high %v259, %v259
      %288 = vrot.lane.b32.xlu0 %v259, 127
      %v289 = vpop.permute.xlu0 %288
      %290 = vrot.lane.b32.xlu0 %v286, 127
      %v291 = vpop.permute.xlu0 %290
      %v292 = vsel %vm239, %v289, %v291
      %v293 = vsel %vm239, %v291, %v289
      %v296 = vcombine.low %v292, %v293
      %v298 = vsub.f32 %v259, %v296
      %v299 = vand.u32 2147483647, %v298
      %v300 = vmul.f32 %v299, %v257
      %301 = vrot.lane.b32.xlu0 %v259, 112
      %v302 = vpop.permute.xlu0 %301
      %303 = vrot.lane.b32.xlu0 %v286, 112
      %v304 = vpop.permute.xlu0 %303
      %v305 = vsel %vm264, %v302, %v304
      %v306 = vsel %vm264, %v304, %v302
      %v309 = vcombine.low %v305, %v306
      %v311 = vsub.f32 %v259, %v309
      %v312 = vand.u32 2147483647, %v311
      %v313 = vmul.f32 %v312, %v282
      %v315 = vrot.slane %v313, 4
      %v317 = vadd.f32 %v313, %v315
      %vm318 = vcmask 1043456
      %v319 = vsel %vm318, %v317, 0.0
      %v321 = vcombine.high %v284, %v284
      %323 = vrot.lane.b32.xlu0 %v284, 127
      %v324 = vpop.permute.xlu0 %323
      %325 = vrot.lane.b32.xlu0 %v321, 127
      %v326 = vpop.permute.xlu0 %325
      %v327 = vsel %vm239, %v324, %v326
      %v328 = vsel %vm239, %v326, %v324
      %v331 = vcombine.low %v327, %v328
      %v333 = vsub.f32 %v284, %v331
      %v334 = vand.u32 2147483647, %v333
      %v335 = vmul.f32 %v334, %v257
      %336 = vrot.lane.b32.xlu0 %v284, 112
      %v337 = vpop.permute.xlu0 %336
      %338 = vrot.lane.b32.xlu0 %v321, 112
      %v339 = vpop.permute.xlu0 %338
      %v340 = vsel %vm264, %v337, %v339
      %v341 = vsel %vm264, %v339, %v337
      %v344 = vcombine.low %v340, %v341
      %v346 = vsub.f32 %v284, %v344
      %v347 = vand.u32 2147483647, %v346
      %v348 = vmul.f32 %v347, %v282
      %v350 = vrot.slane %v335, 4
      %v352 = vadd.f32 %v335, %v350
      %v353 = vsel %vm318, %v352, 0.0
      %v354 = vadd.f32 %v319, %v353
      %v355 = vmul.f32 %v300, %v300
      %v356 = vmul.f32 %v348, %v348
      %v357 = vadd.f32 %v355, %v356
      %v358 = vmax.f32 %v357, 1.1920929e-07
      %v359 = vrsqrt.pop %v358
      %v360 = vmul.f32 %v358, %v359
      %vm361 = vcmp.eq.f32.partialorder %v358, inf
      %v362 = vsel %vm361, %v358, %v360
      %vm363 = vcmp.eq.f32.partialorder %v358, 0.0
      %v364 = vand.u32 %v358, 2147483648
      %v365 = vsel %vm363, %v364, %v362
      %366 = vst [vmem:[%s218] sm:$0xff] %v365
      %v368 = vrot.slane %v300, 4
      %v370 = vadd.f32 %v300, %v368
      %v371 = vsel %vm318, %v370, 0.0
      %v372 = vadd.f32 %v354, %v371
      %v374 = vrot.slane %v348, 4
      %v376 = vadd.f32 %v348, %v374
      %v377 = vsel %vm318, %v376, 0.0
      %v378 = vadd.f32 %v372, %v377
      %379 = vst [vmem:[%s225] sm:$0xff] %v378
      %p380 = scmp.lt.s32.totalorder %s19, 1
      %s381 = scalar_select %p380, %s19, 1
      %p382 = scmp.lt.s32.totalorder %s20, 0
      %s383 = scalar_select %p382, %s20, 0
      %s384 = smul.addr %s383, 2
      %s385 = smul.addr %s381, 2
      %s386 = sadd.s32 %s384, %s385
      %s387 = smul.addr %s386, 4
      %s388 = scalar_lea.vmem %s2, %s387
      %p389 = scmp.lt.s32.totalorder %s19, 1
      %s390 = scalar_select %p389, %s19, 1
      %p391 = scmp.lt.s32.totalorder %s20, 0
      %s392 = scalar_select %p391, %s20, 0
      %s393 = sadd.s32 %s392, %s390
      %s394 = smul.addr %s393, 8
      %s395 = scalar_lea.vmem %s3, %s394
      // Predicated region
      $region29: #{feat_smooth_reg.1} parent=27 // pred_check
        %p396 = pneg %p96
      $region30: #{feat_smooth_reg.1} parent=27 // pred_check_branch
        %398 = sbr.rel (%p396) target = $region32
      $region31: #{feat_smooth_reg.1} parent=27 // pred_region
        _
      $region32: #{feat_smooth_reg.1} parent=27 // pred_fallthru
        _
      // Predicated region
      $region33: #{feat_smooth_reg.1} parent=27 // pred_check
        %p399 = pneg %p124
      $region34: #{feat_smooth_reg.1} parent=27 // pred_check_branch
        %401 = sbr.rel (%p399) target = $region36
      $region35: #{feat_smooth_reg.1} parent=27 // pred_region
        _
      $region36: #{feat_smooth_reg.1} parent=27 // pred_fallthru
        _
    $region28: #{feat_smooth_reg.1} parent=5 // pred_fallthru
      _
    %p402 = scmp.le.s32.totalorder 2, %s10
    // Predicated region
    $region37: #{feat_smooth_reg.1} parent=5 // pred_check
      %p403 = pneg %p402
    $region38: #{feat_smooth_reg.1} parent=5 // pred_check_branch
      %405 = sbr.rel (%p403) target = $region40
    $region39: #{feat_smooth_reg.1} parent=5 // pred_region
      %s406 = ssub.s32 %s10, 2
      // Predicated region
      $region41: #{feat_smooth_reg.1} parent=39 // pred_check
        %p407 = pneg %p102
      $region42: #{feat_smooth_reg.1} parent=39 // pred_check_branch
        %409 = sbr.rel (%p407) target = $region44
      $region43: #{feat_smooth_reg.1} parent=39 // pred_region
        %p410 = scmp.lt.s32.totalorder %s21, 1
        %s411 = scalar_select %p410, %s21, 1
        %p412 = scmp.lt.s32.totalorder %s22, 0
        %s413 = scalar_select %p412, %s22, 0
        %s414 = smul.addr %s413, 2
        %s415 = smul.addr %s411, 2
        %s416 = sadd.s32 %s414, %s415
        %s417 = smul.addr %s416, 4
        %s418 = scalar_lea.vmem %s2, %s417
      $region44: #{feat_smooth_reg.1} parent=39 // pred_fallthru
        _
      // Predicated region
      $region45: #{feat_smooth_reg.1} parent=39 // pred_check
        %p419 = pneg %p130
      $region46: #{feat_smooth_reg.1} parent=39 // pred_check_branch
        %421 = sbr.rel (%p419) target = $region48
      $region47: #{feat_smooth_reg.1} parent=39 // pred_region
        %p422 = scmp.lt.s32.totalorder %s21, 1
        %s423 = scalar_select %p422, %s21, 1
        %p424 = scmp.lt.s32.totalorder %s22, 0
        %s425 = scalar_select %p424, %s22, 0
        %s426 = sadd.s32 %s425, %s423
        %s427 = smul.addr %s426, 8
        %s428 = scalar_lea.vmem %s3, %s427
      $region48: #{feat_smooth_reg.1} parent=39 // pred_fallthru
        _
    $region40: #{feat_smooth_reg.1} parent=5 // pred_fallthru
      _
  $region6: #{feat_smooth_reg.1} parent=0 // loop_footer
    %s14 = sadd.s32 1, %s10
  $region7: #{feat_smooth_reg.1} parent=0 // loop_footer_branch
    %9 = sbr.rel target = $region3
  $region8: #{feat_smooth_reg.1} parent=0 // loop_exit
    _

</llo_original>
